<compile_context>
chip_gen: v7x
topology: tpu7x:2x2x1
jax: 0.10.0
libtpu: 0.0.40
codegen_flags: <defaults>
</compile_context>

<pallas_src>
import functools

import jax
import jax.numpy as jnp
from jax.experimental import pallas as pl
from jax.experimental.pallas import tpu as pltpu

# ---- small, module-consistent shapes --------------------------------------
IMAGE_HW = (16, 16)   # H, W
CHANNELS = 4          # image_size[2] in the module
KERNEL = (8, 8)       # scaled-down kernel_size
STRIDE = 4            # module: self.stride = 4
PADDING = 2           # scaled-down padding
N_MEM = 64            # synthetic faiss memory size
N_PAD = 128           # memory bank padded to a full lane width
NUM_CLASSES = 5
CLASS_PAD = 128       # class axis padded to a full lane width (lane-dense)
BATCH = 8             # images per kernel call -> M = BATCH * 16 = 128 MXU rows
MM_SENTINEL = jnp.float32(3e38)   # ||m||^2 for padded bank slots (never wins)


# ---------------------------------------------------------------------------
# Glue: torch.nn.functional.unfold equivalent (channel-last input image).
# ---------------------------------------------------------------------------
def unfold_hwc(image_hwc, kernel, stride, padding):
    """Equivalent of:
       unfold(image.permute(2,0,1).unsqueeze(0)).squeeze(0).permute(1,0)
       -> (L, C*kh*kw) float32, feature order (C, kh, kw), spatial row-major."""
    H, W, C = image_hwc.shape
    kh, kw = kernel
    x = jnp.transpose(image_hwc, (2, 0, 1))                           # (C, H, W)
    x = jnp.pad(x, ((0, 0), (padding, padding), (padding, padding)))
    out_h = (H + 2 * padding - kh) // stride + 1
    out_w = (W + 2 * padding - kw) // stride + 1
    ih = jnp.arange(out_h)[:, None] * stride + jnp.arange(kh)[None, :]  # (oh, kh)
    iw = jnp.arange(out_w)[:, None] * stride + jnp.arange(kw)[None, :]  # (ow, kw)
    patches = x[:, ih[:, None, :, None], iw[None, :, None, :]]          # (C,oh,ow,kh,kw)
    patches = jnp.transpose(patches, (1, 2, 0, 3, 4))                   # (oh,ow,C,kh,kw)
    return patches.reshape(out_h * out_w, C * kh * kw).astype(jnp.float32)


# ---------------------------------------------------------------------------
# Bank-static preprocessing, computed ONCE when the "index" is built (the
# analogue of faiss add()).  Cached and reused by every forward call.
# ---------------------------------------------------------------------------
def build_memory_index(mem_vectors, mem_labels):
    """Returns (mem_t_neg2, mm, lab):
       mem_t_neg2 : (D, N_PAD)  == -2 * mem^T, zero in padded columns
       mm         : (1, N_PAD)  == ||m||^2, MM_SENTINEL in padded slots
       lab        : (N_PAD, CLASS_PAD) one-hot labels, zero rows for pads."""
    N, D = mem_vectors.shape
    mem_t_neg2 = jnp.zeros((D, N_PAD), jnp.float32)
    mem_t_neg2 = mem_t_neg2.at[:, :N].set(-2.0 * jnp.transpose(mem_vectors))
    mm = jnp.full((1, N_PAD), MM_SENTINEL, jnp.float32)
    mm = mm.at[0, :N].set(jnp.sum(mem_vectors * mem_vectors, axis=-1))
    lab = jnp.zeros((N_PAD, CLASS_PAD), jnp.float32)
    lab = lab.at[:N].set(jax.nn.one_hot(mem_labels, CLASS_PAD, dtype=jnp.float32))
    return mem_t_neg2, mm, lab


# ---------------------------------------------------------------------------
# Pallas kernel: brute-force squared-L2 1-NN search (faiss IndexFlatL2.search
# with k=1) + fused pattern_mappings class-vote histogram, for a whole batch
# of images in one invocation (no grid).
# ---------------------------------------------------------------------------
def l2_nn_vote_kernel(x_ref, memt_ref, mm_ref, lab_ref, out_ref,
                      *, n_img, l_per_img):
    x = x_ref[...]                                   # (M, D)     flattened patches
    mt = memt_ref[...]                               # (D, N_PAD) == -2 * mem^T
    mm = mm_ref[...]                                 # (1, N_PAD) ||m||^2 (+ sentinel)
    lab = lab_ref[...]                               # (N_PAD, CLASS_PAD) one-hot
    m_rows = x.shape[0]
    n_pad = mt.shape[1]

    # Shifted distance: ||m||^2 - 2 x.m (the -2 is folded into mt).
    # ||x||^2 is constant per row -> cannot change the argmin; added at the end.
    d2 = mm + jnp.dot(x, mt, preferred_element_type=jnp.float32)     # (M, N_PAD)

    min_d2 = jnp.min(d2, axis=-1, keepdims=True)                     # (M, 1)
    ids = jax.lax.broadcasted_iota(jnp.int32, d2.shape, 1)
    # first index attaining the minimum (faiss / np.argmin tie rule)
    idx = jnp.min(jnp.where(d2 <= min_d2, ids, jnp.int32(n_pad)),
                  axis=-1, keepdims=True)                            # (M, 1) i32

    xx = jnp.sum(x * x, axis=-1, keepdims=True)                      # (M, 1)
    dist = min_d2 + xx                                               # (M, 1)

    # Fused pattern_mappings vote: full-M one-hot-label matmul on the MXU,
    # then a per-image sublane reduce on the XLU (no degenerate 1-row matmul).
    winner = (ids == idx).astype(jnp.float32)                        # (M, N_PAD)
    cls = jnp.dot(winner, lab, preferred_element_type=jnp.float32)   # (M, CLASS_PAD)
    counts = jnp.sum(cls.reshape(n_img, l_per_img, cls.shape[-1]), axis=1)  # (n_img, CLASS_PAD)

    # Column -> lane-row transpose of dist/idx without an XLU transpose:
    # diagonal select + sublane reduce (values land in lane j for patch j).
    sel = (jax.lax.broadcasted_iota(jnp.int32, (m_rows, cls.shape[-1]), 0) ==
           jax.lax.broadcasted_iota(jnp.int32, (m_rows, cls.shape[-1]), 1))
    dist_row = jnp.sum(jnp.where(sel, dist, 0.0), axis=0, keepdims=True)      # (1, 128)
    idx_row = jnp.sum(jnp.where(sel, idx.astype(jnp.float32), 0.0),
                      axis=0, keepdims=True)                                  # (1, 128)

    # Single lane-dense output block (one unmasked output DMA):
    #   rows [0, n_img)   per-image class histograms
    #   row  n_img        nearest squared distances (patch j in lane j)
    #   row  n_img + 1    nearest bank indices as exact small floats
    #   remaining rows    zero padding
    out_ref[...] = jnp.zeros_like(out_ref)
    out_ref[0:n_img, :] = counts
    out_ref[n_img:n_img + 1, :] = dist_row
    out_ref[n_img + 1:n_img + 2, :] = idx_row


def nearest_pattern_vote(patches_flat, mem_t_neg2, mm, lab, n_img, l_per_img):
    M, D = patches_flat.shape
    assert M == n_img * l_per_img
    assert M <= CLASS_PAD, "dist/idx pack into one lane row; need M <= 128"
    out_rows = ((n_img + 2 + 7) // 8) * 8                            # sublane-aligned

    kernel = functools.partial(l2_nn_vote_kernel, n_img=n_img, l_per_img=l_per_img)
    packed = pl.pallas_call(
        kernel,
        out_shape=jax.ShapeDtypeStruct((out_rows, CLASS_PAD), jnp.float32),
        in_specs=[pl.BlockSpec(memory_space=pltpu.MemorySpace.VMEM)] * 4,
        out_specs=pl.BlockSpec(memory_space=pltpu.MemorySpace.VMEM),
    )(patches_flat, mem_t_neg2, mm, lab)

    counts = packed[:n_img, :NUM_CLASSES]                            # (B, 5)
    dists = packed[n_img, :M].reshape(n_img, l_per_img)              # (B, L)
    idxs = packed[n_img + 1, :M].astype(jnp.int32).reshape(n_img, l_per_img)
    return counts, dists, idxs


# ---------------------------------------------------------------------------
# Full NeuralMem.forward equivalent (batched over images).
# ---------------------------------------------------------------------------
def neural_mem_forward(images_bhwc, mem_index):
    mem_t_neg2, mm, lab = mem_index
    patches = jax.vmap(lambda im: unfold_hwc(im, KERNEL, STRIDE, PADDING))(images_bhwc)
    B, L, D = patches.shape
    patches_flat = patches.reshape(B * L, D)

    counts, dists, idxs = nearest_pattern_vote(
        patches_flat, mem_t_neg2, mm, lab, B, L)

    # top-3 most common classes per image.
    # TODO(synk): python Counter insertion-order tie-breaking from the original
    # module is not reproduced; ties resolve to the lowest class id here.
    _, top3 = jax.lax.top_k(counts, 3)
    return top3, counts, dists, idxs


if __name__ == "__main__":
    key = jax.random.PRNGKey(0)
    k_img, k_mem = jax.random.split(key)

    images = jax.random.uniform(
        k_img, (BATCH, IMAGE_HW[0], IMAGE_HW[1], CHANNELS), dtype=jnp.float32)

    D = CHANNELS * KERNEL[0] * KERNEL[1]                              # 256
    # Deterministic synthetic "faiss index" contents + per-pattern class labels.
    # TODO(synk): faiss add()/train() (index construction) has no Pallas
    # equivalent; the bank is synthesized here.
    mem_vectors = jax.random.normal(k_mem, (N_MEM, D), dtype=jnp.float32)
    mem_labels = jnp.arange(N_MEM, dtype=jnp.int32) % NUM_CLASSES

    # Built once, reused for every forward call (bank-static preprocessing).
    mem_index = build_memory_index(mem_vectors, mem_labels)

    top3, counts, dists, idxs = neural_mem_forward(images, mem_index)
    jax.block_until_ready((top3, counts, dists, idxs))

    # pure-JAX reference check: exact squared-L2 1-NN + per-image class vote
    patches = jax.vmap(lambda im: unfold_hwc(im, KERNEL, STRIDE, PADDING))(images)  # (B,L,D)
    diff = patches[:, :, None, :] - mem_vectors[None, None, :, :]     # (B,L,N,D)
    ref_d = jnp.sum(diff * diff, axis=-1)                             # (B,L,N)
    ref_idx = jnp.argmin(ref_d, axis=-1)                              # (B,L)
    ref_min = jnp.min(ref_d, axis=-1)                                 # (B,L)
    ref_counts = jnp.sum(
        jax.nn.one_hot(mem_labels[ref_idx], NUM_CLASSES, dtype=jnp.float32), axis=1)

    assert bool(jnp.all(ref_idx == idxs)), "argmin mismatch"
    assert bool(jnp.allclose(ref_min, dists, atol=5e-2, rtol=1e-4)), "distance mismatch"
    assert bool(jnp.allclose(ref_counts, counts, atol=1e-3)), "vote counts mismatch"

    print("KERNEL_OK")
</pallas_src>

<mosaic_0001>
module attributes {stable_mosaic.version = 11 : i64} {
  func.func @l2_nn_vote_kernel(%arg0: memref<128x256xf32, #tpu.memory_space<vmem>>, %arg1: memref<256x128xf32, #tpu.memory_space<vmem>>, %arg2: memref<1x128xf32, #tpu.memory_space<vmem>>, %arg3: memref<128x128xf32, #tpu.memory_space<vmem>>, %arg4: memref<16x128xf32, #tpu.memory_space<vmem>>) attributes {dimension_semantics = [], scalar_prefetch = 0 : i64, scratch_operands = 0 : i64, tpu.core_type = #tpu.core_type<tc>} {
    %c0 = arith.constant 0 : index
    %c0_0 = arith.constant 0 : index
    %0 = vector.load %arg0[%c0, %c0_0] : memref<128x256xf32, #tpu.memory_space<vmem>>, vector<128x256xf32>
    %c0_1 = arith.constant 0 : index
    %c0_2 = arith.constant 0 : index
    %1 = vector.load %arg1[%c0_1, %c0_2] : memref<256x128xf32, #tpu.memory_space<vmem>>, vector<256x128xf32>
    %c0_3 = arith.constant 0 : index
    %c0_4 = arith.constant 0 : index
    %2 = vector.load %arg2[%c0_3, %c0_4] : memref<1x128xf32, #tpu.memory_space<vmem>>, vector<1x128xf32>
    %c0_5 = arith.constant 0 : index
    %c0_6 = arith.constant 0 : index
    %3 = vector.load %arg3[%c0_5, %c0_6] : memref<128x128xf32, #tpu.memory_space<vmem>>, vector<128x128xf32>
    %cst = arith.constant dense<0.000000e+00> : vector<128x128xf32>
    %4 = tpu.matmul %0, %1, %cst {dimension_numbers = #tpu.dot_dimension_numbers<[1], [0], [0], [1], [0, 0, 1, 1], [], []>} : vector<128x256xf32>, vector<256x128xf32>, vector<128x128xf32> -> vector<128x128xf32>
    %5 = vector.broadcast %2 : vector<1x128xf32> to vector<128x128xf32>
    %6 = arith.addf %5, %4 : vector<128x128xf32>
    %cst_7 = arith.constant dense<0x7F800000> : vector<128xf32>
    %7 = vector.multi_reduction <minimumf>, %6, %cst_7 [1] : vector<128x128xf32> to vector<128xf32>
    %8 = vector.shape_cast %7 : vector<128xf32> to vector<128x1xf32>
    %9 = tpu.iota {dimensions = array<i32: 1>} : vector<128x128xi32>
    %10 = vector.broadcast %8 : vector<128x1xf32> to vector<128x128xf32>
    %11 = arith.cmpf ole, %6, %10 : vector<128x128xf32>
    %c128_i32 = arith.constant 128 : i32
    %12 = vector.broadcast %c128_i32 : i32 to vector<128x128xi32>
    %13 = arith.select %11, %9, %12 : vector<128x128xi1>, vector<128x128xi32>
    %cst_8 = arith.constant dense<2147483647> : vector<128xi32>
    %14 = vector.multi_reduction <minsi>, %13, %cst_8 [1] : vector<128x128xi32> to vector<128xi32>
    %15 = vector.shape_cast %14 : vector<128xi32> to vector<128x1xi32>
    %16 = arith.mulf %0, %0 : vector<128x256xf32>
    %cst_9 = arith.constant dense<0.000000e+00> : vector<128xf32>
    %17 = vector.multi_reduction <add>, %16, %cst_9 [1] : vector<128x256xf32> to vector<128xf32>
    %18 = vector.shape_cast %17 : vector<128xf32> to vector<128x1xf32>
    %19 = arith.addf %8, %18 : vector<128x1xf32>
    %20 = vector.broadcast %15 : vector<128x1xi32> to vector<128x128xi32>
    %21 = arith.cmpi eq, %9, %20 : vector<128x128xi32>
    %22 = arith.extui %21 : vector<128x128xi1> to vector<128x128xi32>
    %23 = arith.sitofp %22 : vector<128x128xi32> to vector<128x128xf32>
    %cst_10 = arith.constant dense<0.000000e+00> : vector<128x128xf32>
    %24 = tpu.matmul %23, %3, %cst_10 {dimension_numbers = #tpu.dot_dimension_numbers<[1], [0], [0], [1], [0, 0, 1, 1], [], []>} : vector<128x128xf32>, vector<128x128xf32>, vector<128x128xf32> -> vector<128x128xf32>
    %25 = vector.shape_cast %24 : vector<128x128xf32> to vector<8x16x128xf32>
    %cst_11 = arith.constant dense<0.000000e+00> : vector<8x128xf32>
    %26 = vector.multi_reduction <add>, %25, %cst_11 [1] : vector<8x16x128xf32> to vector<8x128xf32>
    %27 = tpu.iota {dimensions = array<i32: 0>} : vector<128x128xi32>
    %28 = tpu.iota {dimensions = array<i32: 1>} : vector<128x128xi32>
    %29 = arith.cmpi eq, %27, %28 : vector<128x128xi32>
    %cst_12 = arith.constant 0.000000e+00 : f32
    %30 = vector.shape_cast %19 : vector<128x1xf32> to vector<128x1xf32>
    %31 = vector.broadcast %30 : vector<128x1xf32> to vector<128x128xf32>
    %32 = vector.broadcast %cst_12 : f32 to vector<128x128xf32>
    %33 = arith.select %29, %31, %32 : vector<128x128xi1>, vector<128x128xf32>
    %cst_13 = arith.constant dense<0.000000e+00> : vector<128xf32>
    %34 = vector.multi_reduction <add>, %33, %cst_13 [0] : vector<128x128xf32> to vector<128xf32>
    %35 = vector.shape_cast %34 : vector<128xf32> to vector<1x128xf32>
    %36 = arith.sitofp %15 : vector<128x1xi32> to vector<128x1xf32>
    %cst_14 = arith.constant 0.000000e+00 : f32
    %37 = vector.shape_cast %36 : vector<128x1xf32> to vector<128x1xf32>
    %38 = vector.broadcast %37 : vector<128x1xf32> to vector<128x128xf32>
    %39 = vector.broadcast %cst_14 : f32 to vector<128x128xf32>
    %40 = arith.select %29, %38, %39 : vector<128x128xi1>, vector<128x128xf32>
    %cst_15 = arith.constant dense<0.000000e+00> : vector<128xf32>
    %41 = vector.multi_reduction <add>, %40, %cst_15 [0] : vector<128x128xf32> to vector<128xf32>
    %42 = vector.shape_cast %41 : vector<128xf32> to vector<1x128xf32>
    %cst_16 = arith.constant 0.000000e+00 : f32
    %43 = vector.broadcast %cst_16 : f32 to vector<16x128xf32>
    %c0_17 = arith.constant 0 : index
    %c0_18 = arith.constant 0 : index
    %44 = vector.load %arg4[%c0_17, %c0_18] : memref<16x128xf32, #tpu.memory_space<vmem>>, vector<16x128xf32>
    tpu.vector_store %arg4[%c0_17, %c0_18], %43 {strides = array<i32>} : memref<16x128xf32, #tpu.memory_space<vmem>>, vector<16x128xf32>,
    %c0_19 = arith.constant 0 : index
    %c0_20 = arith.constant 0 : index
    %45 = vector.load %arg4[%c0_19, %c0_20] : memref<16x128xf32, #tpu.memory_space<vmem>>, vector<8x128xf32>
    tpu.vector_store %arg4[%c0_19, %c0_20], %26 {strides = array<i32>} : memref<16x128xf32, #tpu.memory_space<vmem>>, vector<8x128xf32>,
    %c8 = arith.constant 8 : index
    %c0_21 = arith.constant 0 : index
    %46 = vector.load %arg4[%c8, %c0_21] : memref<16x128xf32, #tpu.memory_space<vmem>>, vector<1x128xf32>
    tpu.vector_store %arg4[%c8, %c0_21], %35 {strides = array<i32>} : memref<16x128xf32, #tpu.memory_space<vmem>>, vector<1x128xf32>,
    %c9 = arith.constant 9 : index
    %c0_22 = arith.constant 0 : index
    %47 = vector.load %arg4[%c9, %c0_22] : memref<16x128xf32, #tpu.memory_space<vmem>>, vector<1x128xf32>
    tpu.vector_store %arg4[%c9, %c0_22], %42 {strides = array<i32>} : memref<16x128xf32, #tpu.memory_space<vmem>>, vector<1x128xf32>,
    return
  }
}

</mosaic_0001>

<llo_original>
// kernel: tpu_custom_call.1
$region0: #{tpu_custom_call.1}
  #allocation0 [shape = 'u32[]', space=smem, size = 0x4, offset = 0x4, fixed_abs, tag = 'smem constant byte address 0x4 - core index']
  #allocation1 [shape = 'u32[144,128]{1,0:T(1,128)}', space=vmem, size = 0x12000, scoped, tag = 'internal scratch']
  %s0 = inlined_call_operand.hbm [shape: f32[128,256], index: 0, kind: input, shape index: {}]
  %s1 = inlined_call_operand.hbm [shape: f32[256,128], index: 1, kind: input, shape index: {}]
  %s2 = inlined_call_operand.vmem [shape: f32[1,128], index: 2, kind: input, shape index: {}]
  %s3 = inlined_call_operand.hbm [shape: f32[128,128], index: 3, kind: input, shape index: {}]
  %s4 = inlined_call_operand.hbm [shape: f32[16,128], index: 4, kind: output, shape index: {}]
  %s5 = sld [smem:[#allocation0]]
  $region38: #{tpu_custom_call.1} parent=0
    _
  %s7 = ssub.s32 1, %s5
  %s8 = scalar_select 0, %s7, %s5
  $region1: #{tpu_custom_call.1} parent=0
    #allocation2 [shape = 'u8[131072]{0}', space=vmem, size = 0x20000, scoped, tag = 'input window, operand 0, single buffered']
    #allocation3 [shape = 's32[1]{0}', space=sflag, size = 0x4, scoped, tag = 'scoped memory for tpu_custom_call.1']
    #allocation4 [shape = 's32[1]{0}', space=sflag, size = 0x4, scoped, tag = 'scoped memory for tpu_custom_call.1']
    #allocation5 [shape = 'u8[131072]{0}', space=vmem, size = 0x20000, scoped, tag = 'input window, operand 1, single buffered']
    #allocation6 [shape = 's32[1]{0}', space=sflag, size = 0x4, scoped, tag = 'scoped memory for tpu_custom_call.1']
    #allocation7 [shape = 'u8[65536]{0}', space=vmem, size = 0x10000, scoped, tag = 'input window, operand 3, single buffered']
    #allocation8 [shape = 'u8[8192]{0}', space=vmem, size = 0x2000, scoped, tag = 'output window, operand 0, single buffered']
    %9 = vsyncpa [#allocation3], 0
    %10 = vsyncpa [#allocation6], 0
    %11 = vsyncpa [#allocation4], 0
    // Predicated region
    $region2: #{tpu_custom_call.1} parent=1 // pred_check
      _
    $region3: #{tpu_custom_call.1} parent=1 // pred_check_branch
      %13 = sbr.rel (0) target = $region5
    $region4: #{tpu_custom_call.1} parent=1 // pred_region
      %s15 = ssub.s32 4096, 4096
      %16 = vsyncadd [#allocation3], %s15
      %s17 = sshll.u32 [#allocation2], 4
      %s18 = int_to_ptr.vmem [resolvable:$true] %s17
      %23 = dma.hbm_to_vmem [thread:$0]  %s0, 4096, %s18, [#allocation3], 256, 256, 16
    $region5: #{tpu_custom_call.1} parent=1 // pred_fallthru
      _
    // Predicated region
    $region6: #{tpu_custom_call.1} parent=1 // pred_check
      _
    $region7: #{tpu_custom_call.1} parent=1 // pred_check_branch
      %25 = sbr.rel (0) target = $region9
    $region8: #{tpu_custom_call.1} parent=1 // pred_region
      %s27 = ssub.s32 4096, 4096
      %28 = vsyncadd [#allocation6], %s27
      %s29 = sshll.u32 [#allocation5], 4
      %s30 = int_to_ptr.vmem [resolvable:$true] %s29
      %35 = dma.hbm_to_vmem [thread:$0]  %s1, 4096, %s30, [#allocation6], 128, 128, 8
    $region9: #{tpu_custom_call.1} parent=1 // pred_fallthru
      _
    // Predicated region
    $region10: #{tpu_custom_call.1} parent=1 // pred_check
      _
    $region11: #{tpu_custom_call.1} parent=1 // pred_check_branch
      %37 = sbr.rel (0) target = $region13
    $region12: #{tpu_custom_call.1} parent=1 // pred_region
      _
    $region13: #{tpu_custom_call.1} parent=1 // pred_fallthru
      _
    // Predicated region
    $region14: #{tpu_custom_call.1} parent=1 // pred_check
      _
    $region15: #{tpu_custom_call.1} parent=1 // pred_check_branch
      %39 = sbr.rel (0) target = $region17
    $region16: #{tpu_custom_call.1} parent=1 // pred_region
      %s41 = ssub.s32 2048, 2048
      %42 = vsyncadd [#allocation6], %s41
      %s43 = sshll.u32 [#allocation7], 4
      %s44 = int_to_ptr.vmem [resolvable:$true] %s43
      %49 = dma.hbm_to_vmem [thread:$0]  %s3, 2048, %s44, [#allocation6], 128, 128, 8
    $region17: #{tpu_custom_call.1} parent=1 // pred_fallthru
      _
    // Predicated region
    $region18: #{tpu_custom_call.1} parent=1 // pred_check
      _
    $region19: #{tpu_custom_call.1} parent=1 // pred_check_branch
      %51 = sbr.rel (0) target = $region21
    $region20: #{tpu_custom_call.1} parent=1 // pred_region
      %52 = dma.done [#allocation3], 4096
    $region21: #{tpu_custom_call.1} parent=1 // pred_fallthru
      _
    // Predicated region
    $region22: #{tpu_custom_call.1} parent=1 // pred_check
      _
    $region23: #{tpu_custom_call.1} parent=1 // pred_check_branch
      %54 = sbr.rel (0) target = $region25
    $region24: #{tpu_custom_call.1} parent=1 // pred_region
      %55 = dma.done [#allocation6], 4096
    $region25: #{tpu_custom_call.1} parent=1 // pred_fallthru
      _
    // Predicated region
    $region26: #{tpu_custom_call.1} parent=1 // pred_check
      _
    $region27: #{tpu_custom_call.1} parent=1 // pred_check_branch
      %57 = sbr.rel (0) target = $region29
    $region28: #{tpu_custom_call.1} parent=1 // pred_region
      %58 = dma.done [#allocation6], 2048
    $region29: #{tpu_custom_call.1} parent=1 // pred_fallthru
      _
    %v59 = vld [vmem:[#allocation2] sm:$0xff]
    %v60 = vld [vmem:[#allocation2 + $0x8] sm:$0xff]
    %v61 = vld [vmem:[#allocation2 + $0x10] sm:$0xff]
    %v62 = vld [vmem:[#allocation2 + $0x18] sm:$0xff]
    %v63 = vld [vmem:[#allocation2 + $0x20] sm:$0xff]
    %v64 = vld [vmem:[#allocation2 + $0x28] sm:$0xff]
    %v65 = vld [vmem:[#allocation2 + $0x30] sm:$0xff]
    %v66 = vld [vmem:[#allocation2 + $0x38] sm:$0xff]
    %v67 = vld [vmem:[#allocation2 + $0x40] sm:$0xff]
    %v68 = vld [vmem:[#allocation2 + $0x48] sm:$0xff]
    %v69 = vld [vmem:[#allocation2 + $0x50] sm:$0xff]
    %v70 = vld [vmem:[#allocation2 + $0x58] sm:$0xff]
    %v71 = vld [vmem:[#allocation2 + $0x60] sm:$0xff]
    %v72 = vld [vmem:[#allocation2 + $0x68] sm:$0xff]
    %v73 = vld [vmem:[#allocation2 + $0x70] sm:$0xff]
    %v74 = vld [vmem:[#allocation2 + $0x78] sm:$0xff]
    %v75 = vld [vmem:[#allocation2 + $0x80] sm:$0xff]
    %v76 = vld [vmem:[#allocation2 + $0x88] sm:$0xff]
    %v77 = vld [vmem:[#allocation2 + $0x90] sm:$0xff]
    %v78 = vld [vmem:[#allocation2 + $0x98] sm:$0xff]
    %v79 = vld [vmem:[#allocation2 + $0xa0] sm:$0xff]
    %v80 = vld [vmem:[#allocation2 + $0xa8] sm:$0xff]
    %v81 = vld [vmem:[#allocation2 + $0xb0] sm:$0xff]
    %v82 = vld [vmem:[#allocation2 + $0xb8] sm:$0xff]
    %v83 = vld [vmem:[#allocation2 + $0xc0] sm:$0xff]
    %v84 = vld [vmem:[#allocation2 + $0xc8] sm:$0xff]
    %v85 = vld [vmem:[#allocation2 + $0xd0] sm:$0xff]
    %v86 = vld [vmem:[#allocation2 + $0xd8] sm:$0xff]
    %v87 = vld [vmem:[#allocation2 + $0xe0] sm:$0xff]
    %v88 = vld [vmem:[#allocation2 + $0xe8] sm:$0xff]
    %v89 = vld [vmem:[#allocation2 + $0xf0] sm:$0xff]
    %v90 = vld [vmem:[#allocation2 + $0xf8] sm:$0xff]
    %v91 = vld [vmem:[#allocation5] sm:$0xff]
    %v92 = vld [vmem:[#allocation5 + $0x8] sm:$0xff]
    %v93 = vld [vmem:[#allocation5 + $0x10] sm:$0xff]
    %v94 = vld [vmem:[#allocation5 + $0x18] sm:$0xff]
    %v95 = vld [vmem:[#allocation5 + $0x20] sm:$0xff]
    %v96 = vld [vmem:[#allocation5 + $0x28] sm:$0xff]
    %v97 = vld [vmem:[#allocation5 + $0x30] sm:$0xff]
    %v98 = vld [vmem:[#allocation5 + $0x38] sm:$0xff]
    %v99 = vld [vmem:[#allocation5 + $0x40] sm:$0xff]
    %v100 = vld [vmem:[#allocation5 + $0x48] sm:$0xff]
    %v101 = vld [vmem:[#allocation5 + $0x50] sm:$0xff]
    %v102 = vld [vmem:[#allocation5 + $0x58] sm:$0xff]
    %v103 = vld [vmem:[#allocation5 + $0x60] sm:$0xff]
    %v104 = vld [vmem:[#allocation5 + $0x68] sm:$0xff]
    %v105 = vld [vmem:[#allocation5 + $0x70] sm:$0xff]
    %v106 = vld [vmem:[#allocation5 + $0x78] sm:$0xff]
    %v107 = vld [vmem:[#allocation5 + $0x80] sm:$0xff]
    %v108 = vld [vmem:[#allocation5 + $0x88] sm:$0xff]
    %v109 = vld [vmem:[#allocation5 + $0x90] sm:$0xff]
    %v110 = vld [vmem:[#allocation5 + $0x98] sm:$0xff]
    %v111 = vld [vmem:[#allocation5 + $0xa0] sm:$0xff]
    %v112 = vld [vmem:[#allocation5 + $0xa8] sm:$0xff]
    %v113 = vld [vmem:[#allocation5 + $0xb0] sm:$0xff]
    %v114 = vld [vmem:[#allocation5 + $0xb8] sm:$0xff]
    %v115 = vld [vmem:[#allocation5 + $0xc0] sm:$0xff]
    %v116 = vld [vmem:[#allocation5 + $0xc8] sm:$0xff]
    %v117 = vld [vmem:[#allocation5 + $0xd0] sm:$0xff]
    %v118 = vld [vmem:[#allocation5 + $0xd8] sm:$0xff]
    %v119 = vld [vmem:[#allocation5 + $0xe0] sm:$0xff]
    %v120 = vld [vmem:[#allocation5 + $0xe8] sm:$0xff]
    %v121 = vld [vmem:[#allocation5 + $0xf0] sm:$0xff]
    %v122 = vld [vmem:[#allocation5 + $0xf8] sm:$0xff]
    %v123 = vld [vmem:[%s2] sm:$0x1]
    %v124 = vld [vmem:[#allocation7] sm:$0xff]
    %v125 = vld [vmem:[#allocation7 + $0x8] sm:$0xff]
    %v126 = vld [vmem:[#allocation7 + $0x10] sm:$0xff]
    %v127 = vld [vmem:[#allocation7 + $0x18] sm:$0xff]
    %v128 = vld [vmem:[#allocation7 + $0x20] sm:$0xff]
    %v129 = vld [vmem:[#allocation7 + $0x28] sm:$0xff]
    %v130 = vld [vmem:[#allocation7 + $0x30] sm:$0xff]
    %v131 = vld [vmem:[#allocation7 + $0x38] sm:$0xff]
    %v132 = vld [vmem:[#allocation7 + $0x40] sm:$0xff]
    %v133 = vld [vmem:[#allocation7 + $0x48] sm:$0xff]
    %v134 = vld [vmem:[#allocation7 + $0x50] sm:$0xff]
    %v135 = vld [vmem:[#allocation7 + $0x58] sm:$0xff]
    %v136 = vld [vmem:[#allocation7 + $0x60] sm:$0xff]
    %v137 = vld [vmem:[#allocation7 + $0x68] sm:$0xff]
    %v138 = vld [vmem:[#allocation7 + $0x70] sm:$0xff]
    %v139 = vld [vmem:[#allocation7 + $0x78] sm:$0xff]
    %140 = vmatprep.subr.mxu0 0.0
    %141 = vmatpush1.msra.mxu0 %v91
    %142 = vmatprep.subr.mxu0 0.0
    %143 = vmatpush1.msra.mxu0 %v92
    %144 = vmatprep.subr.mxu0 0.0
    %145 = vmatpush1.msra.mxu0 %v93
    %146 = vmatprep.subr.mxu0 0.0
    %147 = vmatpush1.msra.mxu0 %v94
    %148 = vmatprep.subr.mxu0 0.0
    %149 = vmatpush1.msra.mxu0 %v95
    %150 = vmatprep.subr.mxu0 0.0
    %151 = vmatpush1.msra.mxu0 %v96
    %152 = vmatprep.subr.mxu0 0.0
    %153 = vmatpush1.msra.mxu0 %v97
    %154 = vmatprep.subr.mxu0 0.0
    %155 = vmatpush1.msra.mxu0 %v98
    %156 = vmatprep.subr.mxu0 0.0
    %157 = vmatpush1.msra.mxu0 %v99
    %158 = vmatprep.subr.mxu0 0.0
    %159 = vmatpush1.msra.mxu0 %v100
    %160 = vmatprep.subr.mxu0 0.0
    %161 = vmatpush1.msra.mxu0 %v101
    %162 = vmatprep.subr.mxu0 0.0
    %163 = vmatpush1.msra.mxu0 %v102
    %164 = vmatprep.subr.mxu0 0.0
    %165 = vmatpush1.msra.mxu0 %v103
    %166 = vmatprep.subr.mxu0 0.0
    %167 = vmatpush1.msra.mxu0 %v104
    %168 = vmatprep.subr.mxu0 0.0
    %169 = vmatpush1.msra.mxu0 %v105
    %170 = vmatprep.subr.mxu0 0.0
    %171 = vmatpush1.msra.mxu0 %v106
    %172 = vmatprep.subr.mxu0 0.0
    %173 = vmatpush1.msra.mxu0 %v107
    %174 = vmatprep.subr.mxu0 0.0
    %175 = vmatpush1.msra.mxu0 %v108
    %176 = vmatprep.subr.mxu0 0.0
    %177 = vmatpush1.msra.mxu0 %v109
    %178 = vmatprep.subr.mxu0 0.0
    %179 = vmatpush1.msra.mxu0 %v110
    %180 = vmatprep.subr.mxu0 0.0
    %181 = vmatpush1.msra.mxu0 %v111
    %182 = vmatprep.subr.mxu0 0.0
    %183 = vmatpush1.msra.mxu0 %v112
    %184 = vmatprep.subr.mxu0 0.0
    %185 = vmatpush1.msra.mxu0 %v113
    %186 = vmatprep.subr.mxu0 0.0
    %187 = vmatpush1.msra.mxu0 %v114
    %188 = vmatprep.subr.mxu0 0.0
    %189 = vmatpush1.msra.mxu0 %v115
    %190 = vmatprep.subr.mxu0 0.0
    %191 = vmatpush1.msra.mxu0 %v116
    %192 = vmatprep.subr.mxu0 0.0
    %193 = vmatpush1.msra.mxu0 %v117
    %194 = vmatprep.subr.mxu0 0.0
    %195 = vmatpush1.msra.mxu0 %v118
    %196 = vmatprep.subr.mxu0 0.0
    %197 = vmatpush1.msra.mxu0 %v119
    %198 = vmatprep.subr.mxu0 0.0
    %199 = vmatpush1.msra.mxu0 %v120
    %200 = vmatprep.subr.mxu0 0.0
    %201 = vmatpush1.msra.mxu0 %v121
    %202 = vmatprep.subr.mxu0 0.0
    %203 = vmatpush1.msra.mxu0 %v122
    %204 = vmatprep.mubr.f32.mxu0 %v60
    %205 = vmatmul.mubr.f32.gmra.mrb[0].mxu0 %v59
    %v206 = vpop.f32.mrb[0].mxu0
    %v207 = vadd.f32 0.0, %v206
    %v208 = vpop.f32.mrb[0].mxu0
    %209 = vmatprep.mubr.f32.mxu0 %v62
    %210 = vmatmul.mubr.f32.gmra.mrb[0].mxu0 %v61
    %v211 = vpop.f32.mrb[0].mxu0
    %v212 = vadd.f32 0.0, %v211
    %v213 = vpop.f32.mrb[0].mxu0
    %214 = vmatprep.mubr.f32.mxu0 %v64
    %215 = vmatmul.mubr.f32.gmra.mrb[0].mxu0 %v63
    %v216 = vpop.f32.mrb[0].mxu0
    %v217 = vadd.f32 0.0, %v216
    %v218 = vpop.f32.mrb[0].mxu0
    %219 = vmatprep.mubr.f32.mxu0 %v66
    %220 = vmatmul.mubr.f32.gmra.mrb[0].mxu0 %v65
    %v221 = vpop.f32.mrb[0].mxu0
    %v222 = vadd.f32 0.0, %v221
    %v223 = vpop.f32.mrb[0].mxu0
    %224 = vmatprep.mubr.f32.mxu0 %v68
    %225 = vmatmul.mubr.f32.gmra.mrb[0].mxu0 %v67
    %v226 = vpop.f32.mrb[0].mxu0
    %v227 = vadd.f32 0.0, %v226
    %v228 = vpop.f32.mrb[0].mxu0
    %229 = vmatprep.mubr.f32.mxu0 %v70
    %230 = vmatmul.mubr.f32.gmra.mrb[0].mxu0 %v69
    %v231 = vpop.f32.mrb[0].mxu0
    %v232 = vadd.f32 0.0, %v231
    %v233 = vpop.f32.mrb[0].mxu0
    %234 = vmatprep.mubr.f32.mxu0 %v72
    %235 = vmatmul.mubr.f32.gmra.mrb[0].mxu0 %v71
    %v236 = vpop.f32.mrb[0].mxu0
    %v237 = vadd.f32 0.0, %v236
    %v238 = vpop.f32.mrb[0].mxu0
    %239 = vmatprep.mubr.f32.mxu0 %v74
    %240 = vmatmul.mubr.f32.gmra.mrb[0].mxu0 %v73
    %v241 = vpop.f32.mrb[0].mxu0
    %v242 = vadd.f32 0.0, %v241
    %v243 = vpop.f32.mrb[0].mxu0
    %244 = vmatprep.mubr.f32.mxu0 %v76
    %245 = vmatmul.mubr.f32.gmra.mrb[0].mxu0 %v75
    %v246 = vpop.f32.mrb[0].mxu0
    %v247 = vadd.f32 0.0, %v246
    %v248 = vpop.f32.mrb[0].mxu0
    %249 = vmatprep.mubr.f32.mxu0 %v78
    %250 = vmatmul.mubr.f32.gmra.mrb[0].mxu0 %v77
    %v251 = vpop.f32.mrb[0].mxu0
    %v252 = vadd.f32 0.0, %v251
    %v253 = vpop.f32.mrb[0].mxu0
    %254 = vmatprep.mubr.f32.mxu0 %v80
    %255 = vmatmul.mubr.f32.gmra.mrb[0].mxu0 %v79
    %v256 = vpop.f32.mrb[0].mxu0
    %v257 = vadd.f32 0.0, %v256
    %v258 = vpop.f32.mrb[0].mxu0
    %259 = vmatprep.mubr.f32.mxu0 %v82
    %260 = vmatmul.mubr.f32.gmra.mrb[0].mxu0 %v81
    %v261 = vpop.f32.mrb[0].mxu0
    %v262 = vadd.f32 0.0, %v261
    %v263 = vpop.f32.mrb[0].mxu0
    %264 = vmatprep.mubr.f32.mxu0 %v84
    %265 = vmatmul.mubr.f32.gmra.mrb[0].mxu0 %v83
    %v266 = vpop.f32.mrb[0].mxu0
    %v267 = vadd.f32 0.0, %v266
    %v268 = vpop.f32.mrb[0].mxu0
    %269 = vmatprep.mubr.f32.mxu0 %v86
    %270 = vmatmul.mubr.f32.gmra.mrb[0].mxu0 %v85
    %v271 = vpop.f32.mrb[0].mxu0
    %v272 = vadd.f32 0.0, %v271
    %v273 = vpop.f32.mrb[0].mxu0
    %274 = vmatprep.mubr.f32.mxu0 %v88
    %275 = vmatmul.mubr.f32.gmra.mrb[0].mxu0 %v87
    %v276 = vpop.f32.mrb[0].mxu0
    %v277 = vadd.f32 0.0, %v276
    %v278 = vpop.f32.mrb[0].mxu0
    %279 = vmatprep.mubr.f32.mxu0 %v90
    %280 = vmatmul.mubr.f32.gmra.mrb[0].mxu0 %v89
    %v281 = vpop.f32.mrb[0].mxu0
    %v282 = vadd.f32 0.0, %v281
    %v283 = vpop.f32.mrb[0].mxu0
    %284 = vdwg.mxu0
    %v286 = vlaneseq
    %v287 = vshrl.u32 %v286, 7
    %v288 = vsub.s32 0, %v287
    %v289 = vrot.slane %v123, %v288
    %v291 = vadd.f32 %v289, %v207
    %v292 = vadd.f32 %v289, %v212
    %v293 = vadd.f32 %v289, %v217
    %v294 = vadd.f32 %v289, %v222
    %v295 = vadd.f32 %v289, %v227
    %v296 = vadd.f32 %v289, %v232
    %v297 = vadd.f32 %v289, %v237
    %v298 = vadd.f32 %v289, %v242
    %v299 = vadd.f32 %v289, %v247
    %v300 = vadd.f32 %v289, %v252
    %v301 = vadd.f32 %v289, %v257
    %v302 = vadd.f32 %v289, %v262
    %v303 = vadd.f32 %v289, %v267
    %v304 = vadd.f32 %v289, %v272
    %v305 = vadd.f32 %v289, %v277
    %v306 = vadd.f32 %v289, %v282
    %307 = vmin.xlane.f32.xlu0 %v291
    %v308 = vpop.xlane.xlu0 %307
    %309 = vmin.xlane.f32.xlu0 %v292
    %v310 = vpop.xlane.xlu0 %309
    %311 = vmin.xlane.f32.xlu0 %v293
    %v312 = vpop.xlane.xlu0 %311
    %313 = vmin.xlane.f32.xlu0 %v294
    %v314 = vpop.xlane.xlu0 %313
    %315 = vmin.xlane.f32.xlu0 %v295
    %v316 = vpop.xlane.xlu0 %315
    %317 = vmin.xlane.f32.xlu0 %v296
    %v318 = vpop.xlane.xlu0 %317
    %319 = vmin.xlane.f32.xlu0 %v297
    %v320 = vpop.xlane.xlu0 %319
    %321 = vmin.xlane.f32.xlu0 %v298
    %v322 = vpop.xlane.xlu0 %321
    %323 = vmin.xlane.f32.xlu0 %v299
    %v324 = vpop.xlane.xlu0 %323
    %325 = vmin.xlane.f32.xlu0 %v300
    %v326 = vpop.xlane.xlu0 %325
    %327 = vmin.xlane.f32.xlu0 %v301
    %v328 = vpop.xlane.xlu0 %327
    %329 = vmin.xlane.f32.xlu0 %v302
    %v330 = vpop.xlane.xlu0 %329
    %331 = vmin.xlane.f32.xlu0 %v303
    %v332 = vpop.xlane.xlu0 %331
    %333 = vmin.xlane.f32.xlu0 %v304
    %v334 = vpop.xlane.xlu0 %333
    %335 = vmin.xlane.f32.xlu0 %v305
    %v336 = vpop.xlane.xlu0 %335
    %337 = vmin.xlane.f32.xlu0 %v306
    %v338 = vpop.xlane.xlu0 %337
    %v339 = vlaneseq
    %v340 = vand.u32 %v339, 127
    %vm341 = vcmp.le.f32.partialorder %v291, %v308
    %vm342 = vcmp.le.f32.partialorder %v292, %v310
    %vm343 = vcmp.le.f32.partialorder %v293, %v312
    %vm344 = vcmp.le.f32.partialorder %v294, %v314
    %vm345 = vcmp.le.f32.partialorder %v295, %v316
    %vm346 = vcmp.le.f32.partialorder %v296, %v318
    %vm347 = vcmp.le.f32.partialorder %v297, %v320
    %vm348 = vcmp.le.f32.partialorder %v298, %v322
    %vm349 = vcmp.le.f32.partialorder %v299, %v324
    %vm350 = vcmp.le.f32.partialorder %v300, %v326
    %vm351 = vcmp.le.f32.partialorder %v301, %v328
    %vm352 = vcmp.le.f32.partialorder %v302, %v330
    %vm353 = vcmp.le.f32.partialorder %v303, %v332
    %vm354 = vcmp.le.f32.partialorder %v304, %v334
    %vm355 = vcmp.le.f32.partialorder %v305, %v336
    %vm356 = vcmp.le.f32.partialorder %v306, %v338
    %v357 = vsel %vm341, %v340, 128
    %v358 = vsel %vm342, %v340, 128
    %v359 = vsel %vm343, %v340, 128
    %v360 = vsel %vm344, %v340, 128
    %v361 = vsel %vm345, %v340, 128
    %v362 = vsel %vm346, %v340, 128
    %v363 = vsel %vm347, %v340, 128
    %v364 = vsel %vm348, %v340, 128
    %v365 = vsel %vm349, %v340, 128
    %v366 = vsel %vm350, %v340, 128
    %v367 = vsel %vm351, %v340, 128
    %v368 = vsel %vm352, %v340, 128
    %v369 = vsel %vm353, %v340, 128
    %v370 = vsel %vm354, %v340, 128
    %v371 = vsel %vm355, %v340, 128
    %v372 = vsel %vm356, %v340, 128
    %v373 = vand.u32 %v357, 65535
    %v374 = vshra.s32 %v357, 16
    %v375 = vcvt.s32.f32 %v373
    %v376 = vcvt.s32.f32 %v374
    %377 = vmin.xlane.f32.xlu0 %v376
    %v378 = vpop.xlane.xlu0 %377
    %vm379 = vcmp.eq.f32.partialorder %v376, %v378
    %v380 = vsel %vm379, %v375, inf
    %381 = vmin.xlane.f32.xlu0 %v380
    %v382 = vpop.xlane.xlu0 %381
    %v383 = vcvt.f32.s32 %v382
    %v384 = vcvt.f32.s32 %v378
    %v385 = vshll.u32 %v384, 16
    %v386 = vadd.s32 %v385, %v383
    %v387 = vand.u32 %v358, 65535
    %v388 = vshra.s32 %v358, 16
    %v389 = vcvt.s32.f32 %v387
    %v390 = vcvt.s32.f32 %v388
    %391 = vmin.xlane.f32.xlu0 %v390
    %v392 = vpop.xlane.xlu0 %391
    %vm393 = vcmp.eq.f32.partialorder %v390, %v392
    %v394 = vsel %vm393, %v389, inf
    %395 = vmin.xlane.f32.xlu0 %v394
    %v396 = vpop.xlane.xlu0 %395
    %v397 = vcvt.f32.s32 %v396
    %v398 = vcvt.f32.s32 %v392
    %v399 = vshll.u32 %v398, 16
    %v400 = vadd.s32 %v399, %v397
    %v401 = vand.u32 %v359, 65535
    %v402 = vshra.s32 %v359, 16
    %v403 = vcvt.s32.f32 %v401
    %v404 = vcvt.s32.f32 %v402
    %405 = vmin.xlane.f32.xlu0 %v404
    %v406 = vpop.xlane.xlu0 %405
    %vm407 = vcmp.eq.f32.partialorder %v404, %v406
    %v408 = vsel %vm407, %v403, inf
    %409 = vmin.xlane.f32.xlu0 %v408
    %v410 = vpop.xlane.xlu0 %409
    %v411 = vcvt.f32.s32 %v410
    %v412 = vcvt.f32.s32 %v406
    %v413 = vshll.u32 %v412, 16
    %v414 = vadd.s32 %v413, %v411
    %v415 = vand.u32 %v360, 65535
    %v416 = vshra.s32 %v360, 16
    %v417 = vcvt.s32.f32 %v415
    %v418 = vcvt.s32.f32 %v416
    %419 = vmin.xlane.f32.xlu0 %v418
    %v420 = vpop.xlane.xlu0 %419
    %vm421 = vcmp.eq.f32.partialorder %v418, %v420
    %v422 = vsel %vm421, %v417, inf
    %423 = vmin.xlane.f32.xlu0 %v422
    %v424 = vpop.xlane.xlu0 %423
    %v425 = vcvt.f32.s32 %v424
    %v426 = vcvt.f32.s32 %v420
    %v427 = vshll.u32 %v426, 16
    %v428 = vadd.s32 %v427, %v425
    %v429 = vand.u32 %v361, 65535
    %v430 = vshra.s32 %v361, 16
    %v431 = vcvt.s32.f32 %v429
    %v432 = vcvt.s32.f32 %v430
    %433 = vmin.xlane.f32.xlu0 %v432
    %v434 = vpop.xlane.xlu0 %433
    %vm435 = vcmp.eq.f32.partialorder %v432, %v434
    %v436 = vsel %vm435, %v431, inf
    %437 = vmin.xlane.f32.xlu0 %v436
    %v438 = vpop.xlane.xlu0 %437
    %v439 = vcvt.f32.s32 %v438
    %v440 = vcvt.f32.s32 %v434
    %v441 = vshll.u32 %v440, 16
    %v442 = vadd.s32 %v441, %v439
    %v443 = vand.u32 %v362, 65535
    %v444 = vshra.s32 %v362, 16
    %v445 = vcvt.s32.f32 %v443
    %v446 = vcvt.s32.f32 %v444
    %447 = vmin.xlane.f32.xlu0 %v446
    %v448 = vpop.xlane.xlu0 %447
    %vm449 = vcmp.eq.f32.partialorder %v446, %v448
    %v450 = vsel %vm449, %v445, inf
    %451 = vmin.xlane.f32.xlu0 %v450
    %v452 = vpop.xlane.xlu0 %451
    %v453 = vcvt.f32.s32 %v452
    %v454 = vcvt.f32.s32 %v448
    %v455 = vshll.u32 %v454, 16
    %v456 = vadd.s32 %v455, %v453
    %v457 = vand.u32 %v363, 65535
    %v458 = vshra.s32 %v363, 16
    %v459 = vcvt.s32.f32 %v457
    %v460 = vcvt.s32.f32 %v458
    %461 = vmin.xlane.f32.xlu0 %v460
    %v462 = vpop.xlane.xlu0 %461
    %vm463 = vcmp.eq.f32.partialorder %v460, %v462
    %v464 = vsel %vm463, %v459, inf
    %465 = vmin.xlane.f32.xlu0 %v464
    %v466 = vpop.xlane.xlu0 %465
    %v467 = vcvt.f32.s32 %v466
    %v468 = vcvt.f32.s32 %v462
    %v469 = vshll.u32 %v468, 16
    %v470 = vadd.s32 %v469, %v467
    %v471 = vand.u32 %v364, 65535
    %v472 = vshra.s32 %v364, 16
    %v473 = vcvt.s32.f32 %v471
    %v474 = vcvt.s32.f32 %v472
    %475 = vmin.xlane.f32.xlu0 %v474
    %v476 = vpop.xlane.xlu0 %475
    %vm477 = vcmp.eq.f32.partialorder %v474, %v476
    %v478 = vsel %vm477, %v473, inf
    %479 = vmin.xlane.f32.xlu0 %v478
    %v480 = vpop.xlane.xlu0 %479
    %v481 = vcvt.f32.s32 %v480
    %v482 = vcvt.f32.s32 %v476
    %v483 = vshll.u32 %v482, 16
    %v484 = vadd.s32 %v483, %v481
    %v485 = vand.u32 %v365, 65535
    %v486 = vshra.s32 %v365, 16
    %v487 = vcvt.s32.f32 %v485
    %v488 = vcvt.s32.f32 %v486
    %489 = vmin.xlane.f32.xlu0 %v488
    %v490 = vpop.xlane.xlu0 %489
    %vm491 = vcmp.eq.f32.partialorder %v488, %v490
    %v492 = vsel %vm491, %v487, inf
    %493 = vmin.xlane.f32.xlu0 %v492
    %v494 = vpop.xlane.xlu0 %493
    %v495 = vcvt.f32.s32 %v494
    %v496 = vcvt.f32.s32 %v490
    %v497 = vshll.u32 %v496, 16
    %v498 = vadd.s32 %v497, %v495
    %v499 = vand.u32 %v366, 65535
    %v500 = vshra.s32 %v366, 16
    %v501 = vcvt.s32.f32 %v499
    %v502 = vcvt.s32.f32 %v500
    %503 = vmin.xlane.f32.xlu0 %v502
    %v504 = vpop.xlane.xlu0 %503
    %vm505 = vcmp.eq.f32.partialorder %v502, %v504
    %v506 = vsel %vm505, %v501, inf
    %507 = vmin.xlane.f32.xlu0 %v506
    %v508 = vpop.xlane.xlu0 %507
    %v509 = vcvt.f32.s32 %v508
    %v510 = vcvt.f32.s32 %v504
    %v511 = vshll.u32 %v510, 16
    %v512 = vadd.s32 %v511, %v509
    %v513 = vand.u32 %v367, 65535
    %v514 = vshra.s32 %v367, 16
    %v515 = vcvt.s32.f32 %v513
    %v516 = vcvt.s32.f32 %v514
    %517 = vmin.xlane.f32.xlu0 %v516
    %v518 = vpop.xlane.xlu0 %517
    %vm519 = vcmp.eq.f32.partialorder %v516, %v518
    %v520 = vsel %vm519, %v515, inf
    %521 = vmin.xlane.f32.xlu0 %v520
    %v522 = vpop.xlane.xlu0 %521
    %v523 = vcvt.f32.s32 %v522
    %v524 = vcvt.f32.s32 %v518
    %v525 = vshll.u32 %v524, 16
    %v526 = vadd.s32 %v525, %v523
    %v527 = vand.u32 %v368, 65535
    %v528 = vshra.s32 %v368, 16
    %v529 = vcvt.s32.f32 %v527
    %v530 = vcvt.s32.f32 %v528
    %531 = vmin.xlane.f32.xlu0 %v530
    %v532 = vpop.xlane.xlu0 %531
    %vm533 = vcmp.eq.f32.partialorder %v530, %v532
    %v534 = vsel %vm533, %v529, inf
    %535 = vmin.xlane.f32.xlu0 %v534
    %v536 = vpop.xlane.xlu0 %535
    %v537 = vcvt.f32.s32 %v536
    %v538 = vcvt.f32.s32 %v532
    %v539 = vshll.u32 %v538, 16
    %v540 = vadd.s32 %v539, %v537
    %v541 = vand.u32 %v369, 65535
    %v542 = vshra.s32 %v369, 16
    %v543 = vcvt.s32.f32 %v541
    %v544 = vcvt.s32.f32 %v542
    %545 = vmin.xlane.f32.xlu0 %v544
    %v546 = vpop.xlane.xlu0 %545
    %vm547 = vcmp.eq.f32.partialorder %v544, %v546
    %v548 = vsel %vm547, %v543, inf
    %549 = vmin.xlane.f32.xlu0 %v548
    %v550 = vpop.xlane.xlu0 %549
    %v551 = vcvt.f32.s32 %v550
    %v552 = vcvt.f32.s32 %v546
    %v553 = vshll.u32 %v552, 16
    %v554 = vadd.s32 %v553, %v551
    %v555 = vand.u32 %v370, 65535
    %v556 = vshra.s32 %v370, 16
    %v557 = vcvt.s32.f32 %v555
    %v558 = vcvt.s32.f32 %v556
    %559 = vmin.xlane.f32.xlu0 %v558
    %v560 = vpop.xlane.xlu0 %559
    %vm561 = vcmp.eq.f32.partialorder %v558, %v560
    %v562 = vsel %vm561, %v557, inf
    %563 = vmin.xlane.f32.xlu0 %v562
    %v564 = vpop.xlane.xlu0 %563
    %v565 = vcvt.f32.s32 %v564
    %v566 = vcvt.f32.s32 %v560
    %v567 = vshll.u32 %v566, 16
    %v568 = vadd.s32 %v567, %v565
    %v569 = vand.u32 %v371, 65535
    %v570 = vshra.s32 %v371, 16
    %v571 = vcvt.s32.f32 %v569
    %v572 = vcvt.s32.f32 %v570
    %573 = vmin.xlane.f32.xlu0 %v572
    %v574 = vpop.xlane.xlu0 %573
    %vm575 = vcmp.eq.f32.partialorder %v572, %v574
    %v576 = vsel %vm575, %v571, inf
    %577 = vmin.xlane.f32.xlu0 %v576
    %v578 = vpop.xlane.xlu0 %577
    %v579 = vcvt.f32.s32 %v578
    %v580 = vcvt.f32.s32 %v574
    %v581 = vshll.u32 %v580, 16
    %v582 = vadd.s32 %v581, %v579
    %v583 = vand.u32 %v372, 65535
    %v584 = vshra.s32 %v372, 16
    %v585 = vcvt.s32.f32 %v583
    %v586 = vcvt.s32.f32 %v584
    %587 = vmin.xlane.f32.xlu0 %v586
    %v588 = vpop.xlane.xlu0 %587
    %vm589 = vcmp.eq.f32.partialorder %v586, %v588
    %v590 = vsel %vm589, %v585, inf
    %591 = vmin.xlane.f32.xlu0 %v590
    %v592 = vpop.xlane.xlu0 %591
    %v593 = vcvt.f32.s32 %v592
    %v594 = vcvt.f32.s32 %v588
    %v595 = vshll.u32 %v594, 16
    %v596 = vadd.s32 %v595, %v593
    %v597 = vmul.f32 %v59, %v59
    %v598 = vmul.f32 %v60, %v60
    %v599 = vmul.f32 %v61, %v61
    %v600 = vmul.f32 %v62, %v62
    %v601 = vmul.f32 %v63, %v63
    %v602 = vmul.f32 %v64, %v64
    %v603 = vmul.f32 %v65, %v65
    %v604 = vmul.f32 %v66, %v66
    %v605 = vmul.f32 %v67, %v67
    %v606 = vmul.f32 %v68, %v68
    %v607 = vmul.f32 %v69, %v69
    %v608 = vmul.f32 %v70, %v70
    %v609 = vmul.f32 %v71, %v71
    %v610 = vmul.f32 %v72, %v72
    %v611 = vmul.f32 %v73, %v73
    %v612 = vmul.f32 %v74, %v74
    %v613 = vmul.f32 %v75, %v75
    %v614 = vmul.f32 %v76, %v76
    %v615 = vmul.f32 %v77, %v77
    %v616 = vmul.f32 %v78, %v78
    %v617 = vmul.f32 %v79, %v79
    %v618 = vmul.f32 %v80, %v80
    %v619 = vmul.f32 %v81, %v81
    %v620 = vmul.f32 %v82, %v82
    %v621 = vmul.f32 %v83, %v83
    %v622 = vmul.f32 %v84, %v84
    %v623 = vmul.f32 %v85, %v85
    %v624 = vmul.f32 %v86, %v86
    %v625 = vmul.f32 %v87, %v87
    %v626 = vmul.f32 %v88, %v88
    %v627 = vmul.f32 %v89, %v89
    %v628 = vmul.f32 %v90, %v90
    %v629 = vadd.f32 %v597, %v598
    %630 = vadd.xlane.f32.xlu0 %v629
    %v631 = vpop.xlane.xlu0 %630
    %v632 = vadd.f32 %v599, %v600
    %633 = vadd.xlane.f32.xlu0 %v632
    %v634 = vpop.xlane.xlu0 %633
    %v635 = vadd.f32 %v601, %v602
    %636 = vadd.xlane.f32.xlu0 %v635
    %v637 = vpop.xlane.xlu0 %636
    %v638 = vadd.f32 %v603, %v604
    %639 = vadd.xlane.f32.xlu0 %v638
    %v640 = vpop.xlane.xlu0 %639
    %v641 = vadd.f32 %v605, %v606
    %642 = vadd.xlane.f32.xlu0 %v641
    %v643 = vpop.xlane.xlu0 %642
    %v644 = vadd.f32 %v607, %v608
    %645 = vadd.xlane.f32.xlu0 %v644
    %v646 = vpop.xlane.xlu0 %645
    %v647 = vadd.f32 %v609, %v610
    %648 = vadd.xlane.f32.xlu0 %v647
    %v649 = vpop.xlane.xlu0 %648
    %v650 = vadd.f32 %v611, %v612
    %651 = vadd.xlane.f32.xlu0 %v650
    %v652 = vpop.xlane.xlu0 %651
    %v653 = vadd.f32 %v613, %v614
    %654 = vadd.xlane.f32.xlu0 %v653
    %v655 = vpop.xlane.xlu0 %654
    %v656 = vadd.f32 %v615, %v616
    %657 = vadd.xlane.f32.xlu0 %v656
    %v658 = vpop.xlane.xlu0 %657
    %v659 = vadd.f32 %v617, %v618
    %660 = vadd.xlane.f32.xlu0 %v659
    %v661 = vpop.xlane.xlu0 %660
    %v662 = vadd.f32 %v619, %v620
    %663 = vadd.xlane.f32.xlu0 %v662
    %v664 = vpop.xlane.xlu0 %663
    %v665 = vadd.f32 %v621, %v622
    %666 = vadd.xlane.f32.xlu0 %v665
    %v667 = vpop.xlane.xlu0 %666
    %v668 = vadd.f32 %v623, %v624
    %669 = vadd.xlane.f32.xlu0 %v668
    %v670 = vpop.xlane.xlu0 %669
    %v671 = vadd.f32 %v625, %v626
    %672 = vadd.xlane.f32.xlu0 %v671
    %v673 = vpop.xlane.xlu0 %672
    %v674 = vadd.f32 %v627, %v628
    %675 = vadd.xlane.f32.xlu0 %v674
    %v676 = vpop.xlane.xlu0 %675
    %v677 = vadd.f32 %v308, %v631
    %v678 = vadd.f32 %v310, %v634
    %v679 = vadd.f32 %v312, %v637
    %v680 = vadd.f32 %v314, %v640
    %v681 = vadd.f32 %v316, %v643
    %v682 = vadd.f32 %v318, %v646
    %v683 = vadd.f32 %v320, %v649
    %v684 = vadd.f32 %v322, %v652
    %v685 = vadd.f32 %v324, %v655
    %v686 = vadd.f32 %v326, %v658
    %v687 = vadd.f32 %v328, %v661
    %v688 = vadd.f32 %v330, %v664
    %v689 = vadd.f32 %v332, %v667
    %v690 = vadd.f32 %v334, %v670
    %v691 = vadd.f32 %v336, %v673
    %v692 = vadd.f32 %v338, %v676
    %vm693 = vcmp.eq.s32.totalorder %v340, %v386
    %vm694 = vcmp.eq.s32.totalorder %v340, %v400
    %vm695 = vcmp.eq.s32.totalorder %v340, %v414
    %vm696 = vcmp.eq.s32.totalorder %v340, %v428
    %vm697 = vcmp.eq.s32.totalorder %v340, %v442
    %vm698 = vcmp.eq.s32.totalorder %v340, %v456
    %vm699 = vcmp.eq.s32.totalorder %v340, %v470
    %vm700 = vcmp.eq.s32.totalorder %v340, %v484
    %vm701 = vcmp.eq.s32.totalorder %v340, %v498
    %vm702 = vcmp.eq.s32.totalorder %v340, %v512
    %vm703 = vcmp.eq.s32.totalorder %v340, %v526
    %vm704 = vcmp.eq.s32.totalorder %v340, %v540
    %vm705 = vcmp.eq.s32.totalorder %v340, %v554
    %vm706 = vcmp.eq.s32.totalorder %v340, %v568
    %vm707 = vcmp.eq.s32.totalorder %v340, %v582
    %vm708 = vcmp.eq.s32.totalorder %v340, %v596
    %v709 = vsel %vm693, 1, 0
    %v710 = vsel %vm694, 1, 0
    %v711 = vsel %vm695, 1, 0
    %v712 = vsel %vm696, 1, 0
    %v713 = vsel %vm697, 1, 0
    %v714 = vsel %vm698, 1, 0
    %v715 = vsel %vm699, 1, 0
    %v716 = vsel %vm700, 1, 0
    %v717 = vsel %vm701, 1, 0
    %v718 = vsel %vm702, 1, 0
    %v719 = vsel %vm703, 1, 0
    %v720 = vsel %vm704, 1, 0
    %v721 = vsel %vm705, 1, 0
    %v722 = vsel %vm706, 1, 0
    %v723 = vsel %vm707, 1, 0
    %v724 = vsel %vm708, 1, 0
    %v725 = vcvt.s32.f32 %v709
    %v726 = vcvt.s32.f32 %v710
    %v727 = vcvt.s32.f32 %v711
    %v728 = vcvt.s32.f32 %v712
    %v729 = vcvt.s32.f32 %v713
    %v730 = vcvt.s32.f32 %v714
    %v731 = vcvt.s32.f32 %v715
    %v732 = vcvt.s32.f32 %v716
    %v733 = vcvt.s32.f32 %v717
    %v734 = vcvt.s32.f32 %v718
    %v735 = vcvt.s32.f32 %v719
    %v736 = vcvt.s32.f32 %v720
    %v737 = vcvt.s32.f32 %v721
    %v738 = vcvt.s32.f32 %v722
    %v739 = vcvt.s32.f32 %v723
    %v740 = vcvt.s32.f32 %v724
    %741 = vmatprep.subr.mxu0 0.0
    %742 = vmatpush1.msra.mxu0 %v124
    %743 = vmatprep.subr.mxu0 0.0
    %744 = vmatpush1.msra.mxu0 %v125
    %745 = vmatprep.subr.mxu0 0.0
    %746 = vmatpush1.msra.mxu0 %v126
    %747 = vmatprep.subr.mxu0 0.0
    %748 = vmatpush1.msra.mxu0 %v127
    %749 = vmatprep.subr.mxu0 0.0
    %750 = vmatpush1.msra.mxu0 %v128
    %751 = vmatprep.subr.mxu0 0.0
    %752 = vmatpush1.msra.mxu0 %v129
    %753 = vmatprep.subr.mxu0 0.0
    %754 = vmatpush1.msra.mxu0 %v130
    %755 = vmatprep.subr.mxu0 0.0
    %756 = vmatpush1.msra.mxu0 %v131
    %757 = vmatprep.subr.mxu0 0.0
    %758 = vmatpush1.msra.mxu0 %v132
    %759 = vmatprep.subr.mxu0 0.0
    %760 = vmatpush1.msra.mxu0 %v133
    %761 = vmatprep.subr.mxu0 0.0
    %762 = vmatpush1.msra.mxu0 %v134
    %763 = vmatprep.subr.mxu0 0.0
    %764 = vmatpush1.msra.mxu0 %v135
    %765 = vmatprep.subr.mxu0 0.0
    %766 = vmatpush1.msra.mxu0 %v136
    %767 = vmatprep.subr.mxu0 0.0
    %768 = vmatpush1.msra.mxu0 %v137
    %769 = vmatprep.subr.mxu0 0.0
    %770 = vmatpush1.msra.mxu0 %v138
    %771 = vmatprep.subr.mxu0 0.0
    %772 = vmatpush1.msra.mxu0 %v139
    %773 = vmatprep.subr.mxu0 0.0
    %774 = vmatpush1.msra.mxu0 0.0
    %775 = vmatprep.subr.mxu0 0.0
    %776 = vmatpush1.msra.mxu0 0.0
    %777 = vmatprep.subr.mxu0 0.0
    %778 = vmatpush1.msra.mxu0 0.0
    %779 = vmatprep.subr.mxu0 0.0
    %780 = vmatpush1.msra.mxu0 0.0
    %781 = vmatprep.subr.mxu0 0.0
    %782 = vmatpush1.msra.mxu0 0.0
    %783 = vmatprep.subr.mxu0 0.0
    %784 = vmatpush1.msra.mxu0 0.0
    %785 = vmatprep.subr.mxu0 0.0
    %786 = vmatpush1.msra.mxu0 0.0
    %787 = vmatprep.subr.mxu0 0.0
    %788 = vmatpush1.msra.mxu0 0.0
    %789 = vmatprep.subr.mxu0 0.0
    %790 = vmatpush1.msra.mxu0 0.0
    %791 = vmatprep.subr.mxu0 0.0
    %792 = vmatpush1.msra.mxu0 0.0
    %793 = vmatprep.subr.mxu0 0.0
    %794 = vmatpush1.msra.mxu0 0.0
    %795 = vmatprep.subr.mxu0 0.0
    %796 = vmatpush1.msra.mxu0 0.0
    %797 = vmatprep.subr.mxu0 0.0
    %798 = vmatpush1.msra.mxu0 0.0
    %799 = vmatprep.subr.mxu0 0.0
    %800 = vmatpush1.msra.mxu0 0.0
    %801 = vmatprep.subr.mxu0 0.0
    %802 = vmatpush1.msra.mxu0 0.0
    %803 = vmatprep.subr.mxu0 0.0
    %804 = vmatpush1.msra.mxu0 0.0
    %805 = vmatprep.mubr.f32.mxu0 0.0
    %806 = vmatmul.mubr.f32.gmra.mrb[0].mxu0 %v725
    %v807 = vpop.f32.mrb[0].mxu0
    %v808 = vadd.f32 0.0, %v807
    %v809 = vpop.f32.mrb[0].mxu0
    %810 = vmatprep.mubr.f32.mxu0 0.0
    %811 = vmatmul.mubr.f32.gmra.mrb[0].mxu0 %v726
    %v812 = vpop.f32.mrb[0].mxu0
    %v813 = vadd.f32 0.0, %v812
    %v814 = vpop.f32.mrb[0].mxu0
    %815 = vmatprep.mubr.f32.mxu0 0.0
    %816 = vmatmul.mubr.f32.gmra.mrb[0].mxu0 %v727
    %v817 = vpop.f32.mrb[0].mxu0
    %v818 = vadd.f32 0.0, %v817
    %v819 = vpop.f32.mrb[0].mxu0
    %820 = vmatprep.mubr.f32.mxu0 0.0
    %821 = vmatmul.mubr.f32.gmra.mrb[0].mxu0 %v728
    %v822 = vpop.f32.mrb[0].mxu0
    %v823 = vadd.f32 0.0, %v822
    %v824 = vpop.f32.mrb[0].mxu0
    %825 = vmatprep.mubr.f32.mxu0 0.0
    %826 = vmatmul.mubr.f32.gmra.mrb[0].mxu0 %v729
    %v827 = vpop.f32.mrb[0].mxu0
    %v828 = vadd.f32 0.0, %v827
    %v829 = vpop.f32.mrb[0].mxu0
    %830 = vmatprep.mubr.f32.mxu0 0.0
    %831 = vmatmul.mubr.f32.gmra.mrb[0].mxu0 %v730
    %v832 = vpop.f32.mrb[0].mxu0
    %v833 = vadd.f32 0.0, %v832
    %v834 = vpop.f32.mrb[0].mxu0
    %835 = vmatprep.mubr.f32.mxu0 0.0
    %836 = vmatmul.mubr.f32.gmra.mrb[0].mxu0 %v731
    %v837 = vpop.f32.mrb[0].mxu0
    %v838 = vadd.f32 0.0, %v837
    %v839 = vpop.f32.mrb[0].mxu0
    %840 = vmatprep.mubr.f32.mxu0 0.0
    %841 = vmatmul.mubr.f32.gmra.mrb[0].mxu0 %v732
    %v842 = vpop.f32.mrb[0].mxu0
    %v843 = vadd.f32 0.0, %v842
    %v844 = vpop.f32.mrb[0].mxu0
    %845 = vmatprep.mubr.f32.mxu0 0.0
    %846 = vmatmul.mubr.f32.gmra.mrb[0].mxu0 %v733
    %v847 = vpop.f32.mrb[0].mxu0
    %v848 = vadd.f32 0.0, %v847
    %v849 = vpop.f32.mrb[0].mxu0
    %850 = vmatprep.mubr.f32.mxu0 0.0
    %851 = vmatmul.mubr.f32.gmra.mrb[0].mxu0 %v734
    %v852 = vpop.f32.mrb[0].mxu0
    %v853 = vadd.f32 0.0, %v852
    %v854 = vpop.f32.mrb[0].mxu0
    %855 = vmatprep.mubr.f32.mxu0 0.0
    %856 = vmatmul.mubr.f32.gmra.mrb[0].mxu0 %v735
    %v857 = vpop.f32.mrb[0].mxu0
    %v858 = vadd.f32 0.0, %v857
    %v859 = vpop.f32.mrb[0].mxu0
    %860 = vmatprep.mubr.f32.mxu0 0.0
    %861 = vmatmul.mubr.f32.gmra.mrb[0].mxu0 %v736
    %v862 = vpop.f32.mrb[0].mxu0
    %v863 = vadd.f32 0.0, %v862
    %v864 = vpop.f32.mrb[0].mxu0
    %865 = vmatprep.mubr.f32.mxu0 0.0
    %866 = vmatmul.mubr.f32.gmra.mrb[0].mxu0 %v737
    %v867 = vpop.f32.mrb[0].mxu0
    %v868 = vadd.f32 0.0, %v867
    %v869 = vpop.f32.mrb[0].mxu0
    %870 = vmatprep.mubr.f32.mxu0 0.0
    %871 = vmatmul.mubr.f32.gmra.mrb[0].mxu0 %v738
    %v872 = vpop.f32.mrb[0].mxu0
    %v873 = vadd.f32 0.0, %v872
    %v874 = vpop.f32.mrb[0].mxu0
    %875 = vmatprep.mubr.f32.mxu0 0.0
    %876 = vmatmul.mubr.f32.gmra.mrb[0].mxu0 %v739
    %v877 = vpop.f32.mrb[0].mxu0
    %v878 = vadd.f32 0.0, %v877
    %v879 = vpop.f32.mrb[0].mxu0
    %880 = vmatprep.mubr.f32.mxu0 0.0
    %881 = vmatmul.mubr.f32.gmra.mrb[0].mxu0 %v740
    %v882 = vpop.f32.mrb[0].mxu0
    %v883 = vadd.f32 0.0, %v882
    %v884 = vpop.f32.mrb[0].mxu0
    %885 = vdwg.mxu0
    %v886 = vadd.f32 %v808, %v813
    %v887 = vrot.slane %v886, 4
    %v888 = vadd.f32 %v886, %v887
    %v889 = vrot.slane %v888, 2
    %v890 = vadd.f32 %v888, %v889
    %v891 = vrot.slane %v890, 1
    %v892 = vadd.f32 %v890, %v891
    %v893 = vadd.f32 %v818, %v823
    %v894 = vrot.slane %v893, 4
    %v895 = vadd.f32 %v893, %v894
    %v896 = vrot.slane %v895, 2
    %v897 = vadd.f32 %v895, %v896
    %v898 = vrot.slane %v897, 1
    %v899 = vadd.f32 %v897, %v898
    %v900 = vadd.f32 %v828, %v833
    %v901 = vrot.slane %v900, 4
    %v902 = vadd.f32 %v900, %v901
    %v903 = vrot.slane %v902, 2
    %v904 = vadd.f32 %v902, %v903
    %v905 = vrot.slane %v904, 1
    %v906 = vadd.f32 %v904, %v905
    %v907 = vadd.f32 %v838, %v843
    %v908 = vrot.slane %v907, 4
    %v909 = vadd.f32 %v907, %v908
    %v910 = vrot.slane %v909, 2
    %v911 = vadd.f32 %v909, %v910
    %v912 = vrot.slane %v911, 1
    %v913 = vadd.f32 %v911, %v912
    %v914 = vadd.f32 %v848, %v853
    %v915 = vrot.slane %v914, 4
    %v916 = vadd.f32 %v914, %v915
    %v917 = vrot.slane %v916, 2
    %v918 = vadd.f32 %v916, %v917
    %v919 = vrot.slane %v918, 1
    %v920 = vadd.f32 %v918, %v919
    %v921 = vadd.f32 %v858, %v863
    %v922 = vrot.slane %v921, 4
    %v923 = vadd.f32 %v921, %v922
    %v924 = vrot.slane %v923, 2
    %v925 = vadd.f32 %v923, %v924
    %v926 = vrot.slane %v925, 1
    %v927 = vadd.f32 %v925, %v926
    %v928 = vadd.f32 %v868, %v873
    %v929 = vrot.slane %v928, 4
    %v930 = vadd.f32 %v928, %v929
    %v931 = vrot.slane %v930, 2
    %v932 = vadd.f32 %v930, %v931
    %v933 = vrot.slane %v932, 1
    %v934 = vadd.f32 %v932, %v933
    %v935 = vadd.f32 %v878, %v883
    %v936 = vrot.slane %v935, 4
    %v937 = vadd.f32 %v935, %v936
    %v938 = vrot.slane %v937, 2
    %v939 = vadd.f32 %v937, %v938
    %v940 = vrot.slane %v939, 1
    %v941 = vadd.f32 %v939, %v940
    %v942 = vlaneseq
    %v943 = vshrl.u32 %v942, 7
    %v944 = vadd.s32 %v943, 8
    %v945 = vadd.s32 %v943, 16
    %v946 = vadd.s32 %v943, 24
    %v947 = vadd.s32 %v943, 32
    %v948 = vadd.s32 %v943, 40
    %v949 = vadd.s32 %v943, 48
    %v950 = vadd.s32 %v943, 56
    %v951 = vadd.s32 %v943, 64
    %v952 = vadd.s32 %v943, 72
    %v953 = vadd.s32 %v943, 80
    %v954 = vadd.s32 %v943, 88
    %v955 = vadd.s32 %v943, 96
    %v956 = vadd.s32 %v943, 104
    %v957 = vadd.s32 %v943, 112
    %v958 = vadd.s32 %v943, 120
    %vm959 = vcmp.eq.s32.totalorder %v943, %v340
    %vm960 = vcmp.eq.s32.totalorder %v944, %v340
    %vm961 = vcmp.eq.s32.totalorder %v945, %v340
    %vm962 = vcmp.eq.s32.totalorder %v946, %v340
    %vm963 = vcmp.eq.s32.totalorder %v947, %v340
    %vm964 = vcmp.eq.s32.totalorder %v948, %v340
    %vm965 = vcmp.eq.s32.totalorder %v949, %v340
    %vm966 = vcmp.eq.s32.totalorder %v950, %v340
    %vm967 = vcmp.eq.s32.totalorder %v951, %v340
    %vm968 = vcmp.eq.s32.totalorder %v952, %v340
    %vm969 = vcmp.eq.s32.totalorder %v953, %v340
    %vm970 = vcmp.eq.s32.totalorder %v954, %v340
    %vm971 = vcmp.eq.s32.totalorder %v955, %v340
    %vm972 = vcmp.eq.s32.totalorder %v956, %v340
    %vm973 = vcmp.eq.s32.totalorder %v957, %v340
    %vm974 = vcmp.eq.s32.totalorder %v958, %v340
    %v975 = vsel %vm959, %v677, 0.0
    %v976 = vsel %vm960, %v678, 0.0
    %v977 = vsel %vm961, %v679, 0.0
    %v978 = vsel %vm962, %v680, 0.0
    %v979 = vsel %vm963, %v681, 0.0
    %v980 = vsel %vm964, %v682, 0.0
    %v981 = vsel %vm965, %v683, 0.0
    %v982 = vsel %vm966, %v684, 0.0
    %v983 = vsel %vm967, %v685, 0.0
    %v984 = vsel %vm968, %v686, 0.0
    %v985 = vsel %vm969, %v687, 0.0
    %v986 = vsel %vm970, %v688, 0.0
    %v987 = vsel %vm971, %v689, 0.0
    %v988 = vsel %vm972, %v690, 0.0
    %v989 = vsel %vm973, %v691, 0.0
    %v990 = vsel %vm974, %v692, 0.0
    %v991 = vadd.f32 %v975, %v976
    %v992 = vadd.f32 %v991, %v977
    %v993 = vadd.f32 %v992, %v978
    %v994 = vadd.f32 %v993, %v979
    %v995 = vadd.f32 %v994, %v980
    %v996 = vadd.f32 %v995, %v981
    %v997 = vadd.f32 %v996, %v982
    %v998 = vadd.f32 %v997, %v983
    %v999 = vadd.f32 %v998, %v984
    %v1000 = vadd.f32 %v999, %v985
    %v1001 = vadd.f32 %v1000, %v986
    %v1002 = vadd.f32 %v1001, %v987
    %v1003 = vadd.f32 %v1002, %v988
    %v1004 = vadd.f32 %v1003, %v989
    %v1005 = vadd.f32 %v1004, %v990
    %v1006 = vrot.slane %v1005, 4
    %v1007 = vadd.f32 %v1005, %v1006
    %v1008 = vrot.slane %v1007, 2
    %v1009 = vadd.f32 %v1007, %v1008
    %v1010 = vrot.slane %v1009, 1
    %v1011 = vadd.f32 %v1009, %v1010
    %v1012 = vcvt.s32.f32 %v386
    %v1013 = vcvt.s32.f32 %v400
    %v1014 = vcvt.s32.f32 %v414
    %v1015 = vcvt.s32.f32 %v428
    %v1016 = vcvt.s32.f32 %v442
    %v1017 = vcvt.s32.f32 %v456
    %v1018 = vcvt.s32.f32 %v470
    %v1019 = vcvt.s32.f32 %v484
    %v1020 = vcvt.s32.f32 %v498
    %v1021 = vcvt.s32.f32 %v512
    %v1022 = vcvt.s32.f32 %v526
    %v1023 = vcvt.s32.f32 %v540
    %v1024 = vcvt.s32.f32 %v554
    %v1025 = vcvt.s32.f32 %v568
    %v1026 = vcvt.s32.f32 %v582
    %v1027 = vcvt.s32.f32 %v596
    %v1028 = vsel %vm959, %v1012, 0.0
    %v1029 = vsel %vm960, %v1013, 0.0
    %v1030 = vsel %vm961, %v1014, 0.0
    %v1031 = vsel %vm962, %v1015, 0.0
    %v1032 = vsel %vm963, %v1016, 0.0
    %v1033 = vsel %vm964, %v1017, 0.0
    %v1034 = vsel %vm965, %v1018, 0.0
    %v1035 = vsel %vm966, %v1019, 0.0
    %v1036 = vsel %vm967, %v1020, 0.0
    %v1037 = vsel %vm968, %v1021, 0.0
    %v1038 = vsel %vm969, %v1022, 0.0
    %v1039 = vsel %vm970, %v1023, 0.0
    %v1040 = vsel %vm971, %v1024, 0.0
    %v1041 = vsel %vm972, %v1025, 0.0
    %v1042 = vsel %vm973, %v1026, 0.0
    %v1043 = vsel %vm974, %v1027, 0.0
    %v1044 = vadd.f32 %v1028, %v1029
    %v1045 = vadd.f32 %v1044, %v1030
    %v1046 = vadd.f32 %v1045, %v1031
    %v1047 = vadd.f32 %v1046, %v1032
    %v1048 = vadd.f32 %v1047, %v1033
    %v1049 = vadd.f32 %v1048, %v1034
    %v1050 = vadd.f32 %v1049, %v1035
    %v1051 = vadd.f32 %v1050, %v1036
    %v1052 = vadd.f32 %v1051, %v1037
    %v1053 = vadd.f32 %v1052, %v1038
    %v1054 = vadd.f32 %v1053, %v1039
    %v1055 = vadd.f32 %v1054, %v1040
    %v1056 = vadd.f32 %v1055, %v1041
    %v1057 = vadd.f32 %v1056, %v1042
    %v1058 = vadd.f32 %v1057, %v1043
    %v1059 = vrot.slane %v1058, 4
    %v1060 = vadd.f32 %v1058, %v1059
    %v1061 = vrot.slane %v1060, 2
    %v1062 = vadd.f32 %v1060, %v1061
    %v1063 = vrot.slane %v1062, 1
    %v1064 = vadd.f32 %v1062, %v1063
    %1065 = vst [vmem:[#allocation8] sm:$0xff] 0.0
    %1066 = vst [vmem:[#allocation8 + $0x8] sm:$0xff] 0.0
    %vm1075 = vcmask 1041409
    %v1076 = vsel %vm1075, %v899, %v892
    %vm1077 = vcmask 1042434
    %v1078 = vsel %vm1077, %v906, %v1076
    %vm1079 = vcmask 1043459
    %v1080 = vsel %vm1079, %v913, %v1078
    %vm1081 = vcmask 1044484
    %v1082 = vsel %vm1081, %v920, %v1080
    %vm1083 = vcmask 1045509
    %v1084 = vsel %vm1083, %v927, %v1082
    %vm1085 = vcmask 1046534
    %v1086 = vsel %vm1085, %v934, %v1084
    %vm1087 = vcmask 1047559
    %v1088 = vsel %vm1087, %v941, %v1086
    %1090 = vst [vmem:[#allocation8] sm:$0xff] %v1088
    %1091 = vst [vmem:[#allocation8 + $0x8] sm:$0x1] %v1011
    %1092 = vst [vmem:[#allocation8 + $0x9] sm:$0x1] %v1064
    // Predicated region
    $region30: #{tpu_custom_call.1} parent=1 // pred_check
      _
    $region31: #{tpu_custom_call.1} parent=1 // pred_check_branch
      %1094 = sbr.rel (0) target = $region33
    $region32: #{tpu_custom_call.1} parent=1 // pred_region
      %s1096 = ssub.s32 256, 256
      %1097 = vsyncadd [#allocation4], %s1096
      %s1098 = sshll.u32 [#allocation8], 4
      %s1099 = int_to_ptr.vmem [resolvable:$true] %s1098
      %1104 = dma.vmem_to_hbm [thread:$0]  %s1099, 256, %s4, [#allocation4], 128, 128, 8
    $region33: #{tpu_custom_call.1} parent=1 // pred_fallthru
      _
    // Predicated region
    $region34: #{tpu_custom_call.1} parent=1 // pred_check
      _
    $region35: #{tpu_custom_call.1} parent=1 // pred_check_branch
      %1106 = sbr.rel (0) target = $region37
    $region36: #{tpu_custom_call.1} parent=1 // pred_region
      %1107 = dma.done [#allocation4], 256
    $region37: #{tpu_custom_call.1} parent=1 // pred_fallthru
      _
    %1108 = vsyncpa [#allocation3], 1
    %1109 = vsyncpa [#allocation6], 1
    %1110 = vsyncpa [#allocation4], 1

</llo_original>
